<compile_context>
chip_gen: v6e
topology: v6e:2x2x1
jax: 0.10.0
libtpu: 0.0.40
codegen_flags: <defaults>
</compile_context>

<pallas_src>
import functools

import jax
import jax.numpy as jnp
from jax.experimental import pallas as pl
from jax.experimental.pallas import tpu as pltpu


# ---------------------------------------------------------------------------
# Kernel: fused  GCN1 -> ReLU -> GCN2 -> mean-pool  for one tile of graphs.
# ---------------------------------------------------------------------------
def _fused_gnn_kernel(x_ref, adj_ref, wf_ref, bf_ref, b1_ref, w2_ref, b2_ref,
                      pool_ref, out_ref):
    adj = adj_ref[0]                                    # (tm, tm) bf16 block-diag
    x = x_ref[0]                                        # (tm, 1)  f32

    # Folded Linear(1, D) @ W1 as a VPU broadcast (no degenerate K=1 matmul).
    h0 = x * wf_ref[...] + bf_ref[...]                  # (tm, Dp) f32

    # GCNConv 1: relu(Ahat @ h0 + b1)   (bf16 MXU inputs, f32 accumulate)
    h1 = jnp.dot(adj, h0.astype(jnp.bfloat16),
                 preferred_element_type=jnp.float32)
    h1 = jnp.maximum(h1 + b1_ref[...], 0.0)

    # GCNConv 2: Ahat @ (h1 @ W2) + b2
    h1w = jnp.dot(h1.astype(jnp.bfloat16), w2_ref[...],
                  preferred_element_type=jnp.float32)
    h2 = jnp.dot(adj, h1w.astype(jnp.bfloat16),
                 preferred_element_type=jnp.float32) + b2_ref[...]

    # global_mean_pool as a small MXU matmul with the per-graph averaging matrix.
    out_ref[0] = jnp.dot(pool_ref[...], h2, preferred_element_type=jnp.float32)


# ---------------------------------------------------------------------------
# Host-side glue (plain JAX / Python)
# ---------------------------------------------------------------------------
def _round_up(x, m):
    return ((x + m - 1) // m) * m


def _choose_graphs_per_tile(batch, n_nodes, row_tile_target, max_rows=2048):
    """Graphs per grid step; tm = gpt * n_nodes rows, adjacency tile (tm, tm)."""
    gpt = max(1, row_tile_target // n_nodes)
    gpt = min(gpt, max(1, max_rows // n_nodes), batch)
    # TODO(synk): graphs with more than max_rows nodes would need an in-graph
    # K-reduction grid axis (two-pass streaming); not implemented here.
    return max(1, gpt)


def build_norm_adj_blocks(edge_index, batch, n_nodes):
    """Per-graph symmetrically-normalized adjacency with self loops (GCN norm).

    Assumes PyG-style batching: each edge stays inside its own graph, graph g
    owning nodes [g*n_nodes, (g+1)*n_nodes).  Duplicate edges double-count,
    matching PyG's scatter-add."""
    src = edge_index[0]
    dst = edge_index[1]
    g = dst // n_nodes
    i = dst % n_nodes
    j = src % n_nodes
    a = jnp.zeros((batch, n_nodes, n_nodes), jnp.float32)
    a = a.at[g, i, j].add(1.0)                    # message j -> i lands at A[g, i, j]
    a = a + jnp.eye(n_nodes, dtype=jnp.float32)[None]
    deg = a.sum(axis=2)                           # in-degree + self loop (>= 1)
    dinv = jax.lax.rsqrt(deg)
    return dinv[:, :, None] * a * dinv[:, None, :]


# ---------------------------------------------------------------------------
# Forward pass
# ---------------------------------------------------------------------------
def protein_branch_gnn(x, edge_index, params, n_nodes, *, row_tile_target=512):
    """x: (batch, n_nodes) float32; edge_index: (2, E) int32 over batch*n_nodes nodes."""
    batch = x.shape[0]
    d = params["wlin"].shape[1]
    d_pad = _round_up(d, 128)

    gpt = _choose_graphs_per_tile(batch, n_nodes, row_tile_target)
    tm = gpt * n_nodes
    b_pad = _round_up(batch, gpt)
    n_tiles = b_pad // gpt

    # --- per-graph normalized adjacency -> block-diagonal (tm, tm) tiles ------
    adj_g = build_norm_adj_blocks(edge_index, batch, n_nodes)         # (B, n, n)
    adj_g = jnp.pad(adj_g, ((0, b_pad - batch), (0, 0), (0, 0)))
    adj4 = adj_g.reshape(n_tiles, gpt, n_nodes, n_nodes)
    eye_g = jnp.eye(gpt, dtype=jnp.float32)
    adj_bd = (adj4[:, :, :, None, :] * eye_g[None, :, None, :, None])
    adj_bd = adj_bd.reshape(n_tiles, tm, tm).astype(jnp.bfloat16)     # streamed bf16

    # --- node scalar features as (n_tiles, tm, 1) tiles ------------------------
    x_t = jnp.pad(x.astype(jnp.float32), ((0, b_pad - batch), (0, 0)))
    x_t = x_t.reshape(n_tiles, tm, 1)

    # --- fold Linear(1, D) through W1: (x*wlin + blin) @ W1 --------------------
    w_fold = params["wlin"].astype(jnp.float32) @ params["w1"].astype(jnp.float32)
    b_fold = params["blin"].astype(jnp.float32) @ params["w1"].astype(jnp.float32)

    def _pad_cols(a):
        return jnp.pad(a.astype(jnp.float32), ((0, 0), (0, d_pad - d)))

    w_fold_p = _pad_cols(w_fold)                                      # (1, Dp)
    b_fold_p = _pad_cols(b_fold)
    b1_p = _pad_cols(params["b1"])
    b2_p = _pad_cols(params["b2"])
    w2_p = jnp.pad(params["w2"].astype(jnp.float32),
                   ((0, d_pad - d), (0, d_pad - d))).astype(jnp.bfloat16)

    # Per-graph averaging matrix: pool[g, g*n + j] = 1/n_nodes.
    pool_mat = (jnp.eye(gpt, dtype=jnp.float32)[:, :, None]
                * jnp.full((1, 1, n_nodes), 1.0 / n_nodes, jnp.float32)
                ).reshape(gpt, tm)

    def tile3(m):
        return (m, 0, 0)

    def const2(m):
        return (0, 0)

    in_specs = [
        pl.BlockSpec((1, tm, 1), tile3),            # x tile
        pl.BlockSpec((1, tm, tm), tile3),           # Ahat diagonal block (bf16)
        pl.BlockSpec((1, d_pad), const2),           # w_fold
        pl.BlockSpec((1, d_pad), const2),           # b_fold
        pl.BlockSpec((1, d_pad), const2),           # b1
        pl.BlockSpec((d_pad, d_pad), const2),       # W2 (bf16)
        pl.BlockSpec((1, d_pad), const2),           # b2
        pl.BlockSpec((gpt, tm), const2),            # pooling matrix
    ]
    out_spec = pl.BlockSpec((1, gpt, d_pad), tile3)

    # Explicit scoped-VMEM budget: double-buffered tiles + intermediates + slack.
    tile_bytes = (2 * tm * tm * 2 + 2 * tm * 4 + d_pad * d_pad * 2
                  + gpt * tm * 4 + 4 * d_pad * 4 + 2 * gpt * d_pad * 4
                  + 5 * tm * d_pad * 4)
    vmem_limit = int(min(max(2 * tile_bytes + (4 << 20), 16 << 20), 48 << 20))

    flops = n_tiles * (4 * tm * tm * d_pad + 2 * tm * d_pad * d_pad
                       + 2 * gpt * tm * d_pad)
    bytes_accessed = (n_tiles * tm * tm * 2 + b_pad * n_nodes * 4
                      + b_pad * d_pad * 4 + d_pad * d_pad * 2)

    pooled = pl.pallas_call(
        _fused_gnn_kernel,
        out_shape=jax.ShapeDtypeStruct((n_tiles, gpt, d_pad), jnp.float32),
        grid=(n_tiles,),
        in_specs=in_specs,
        out_specs=out_spec,
        compiler_params=pltpu.CompilerParams(
            dimension_semantics=("parallel",),
            vmem_limit_bytes=vmem_limit),
        cost_estimate=pl.CostEstimate(flops=flops, transcendentals=0,
                                      bytes_accessed=bytes_accessed),
    )(x_t, adj_bd, w_fold_p, b_fold_p, b1_p, w2_p, b2_p, pool_mat)

    return pooled.reshape(b_pad, d_pad)[:batch, :d]


# ---------------------------------------------------------------------------
# Pure-JAX reference (f32 throughout) and parameter init
# ---------------------------------------------------------------------------
def reference_forward(x, edge_index, params, n_nodes):
    batch = x.shape[0]
    n_total = batch * n_nodes
    src, dst = edge_index[0], edge_index[1]
    a = jnp.zeros((n_total, n_total), jnp.float32).at[dst, src].add(1.0)
    a = a + jnp.eye(n_total, dtype=jnp.float32)
    dinv = jax.lax.rsqrt(a.sum(axis=1))
    ahat = dinv[:, None] * a * dinv[None, :]
    h = x.reshape(-1, 1) @ params["wlin"] + params["blin"]
    h = jnp.maximum(ahat @ (h @ params["w1"]) + params["b1"], 0.0)
    h = ahat @ (h @ params["w2"]) + params["b2"]
    return h.reshape(batch, n_nodes, -1).mean(axis=1)


def init_params(key, latent_dim):
    k = jax.random.split(key, 6)
    scale = 0.1
    return {
        "wlin": scale * jax.random.normal(k[0], (1, latent_dim), jnp.float32),
        "blin": scale * jax.random.normal(k[1], (1, latent_dim), jnp.float32),
        "w1":   scale * jax.random.normal(k[2], (latent_dim, latent_dim), jnp.float32),
        "b1":   scale * jax.random.normal(k[3], (1, latent_dim), jnp.float32),
        "w2":   scale * jax.random.normal(k[4], (latent_dim, latent_dim), jnp.float32),
        "b2":   scale * jax.random.normal(k[5], (1, latent_dim), jnp.float32),
    }


if __name__ == "__main__":
    batch = 2
    n_nodes = 8
    latent_dim = 32

    key = jax.random.PRNGKey(0)
    kx, kp = jax.random.split(key)

    # Node scalar features: (batch, n_nodes)
    x = jax.random.normal(kx, (batch, n_nodes), jnp.float32)

    # Deterministic edge_index: bidirectional ring inside each graph.
    src_list, dst_list = [], []
    for g in range(batch):
        off = g * n_nodes
        for i in range(n_nodes):
            a = off + i
            b = off + (i + 1) % n_nodes
            src_list += [a, b]
            dst_list += [b, a]
    edge_index = jnp.array([src_list, dst_list], dtype=jnp.int32)     # (2, 32)

    params = init_params(kp, latent_dim)

    # Small row_tile_target so the demo exercises a multi-tile (grid > 1) path.
    fwd = jax.jit(functools.partial(protein_branch_gnn, n_nodes=n_nodes,
                                    row_tile_target=8))
    out = jax.block_until_ready(fwd(x, edge_index, params))
    assert out.shape == (batch, latent_dim)

    # Mixed-precision (bf16 adjacency / weights) vs f32 reference: loose tol.
    ref = reference_forward(x, edge_index, params, n_nodes)
    err = float(jnp.max(jnp.abs(out - ref)))
    assert err < 2e-2, f"max abs err {err}"
    print("KERNEL_OK")
</pallas_src>

<mosaic_0001>
module attributes {stable_mosaic.version = 11 : i64} {
  func.func private @main(%arg0: i32) attributes {dimension_semantics = [#tpu.dimension_semantics<core_parallel>], iteration_bounds = array<i64: 2>, tpu.core_type = #tpu.core_type<sc_scalar_subcore>, window_params = []} {
    return
  }
}

module attributes {stable_mosaic.version = 11 : i64} {
  func.func private @main(%arg0: i32) attributes {dimension_semantics = [#tpu.dimension_semantics<core_parallel>], iteration_bounds = array<i64: 2>, tpu.core_type = #tpu.core_type<sc_scalar_subcore>, window_params = []} {
    return
  }
}

module attributes {stable_mosaic.version = 11 : i64} {
  func.func @_fused_gnn_kernel(%arg0: i32, %arg1: memref<1x8x1xf32, #tpu.memory_space<vmem>>, %arg2: memref<1x8x8xbf16, #tpu.memory_space<vmem>>, %arg3: memref<1x128xf32, #tpu.memory_space<vmem>>, %arg4: memref<1x128xf32, #tpu.memory_space<vmem>>, %arg5: memref<1x128xf32, #tpu.memory_space<vmem>>, %arg6: memref<128x128xbf16, #tpu.memory_space<vmem>>, %arg7: memref<1x128xf32, #tpu.memory_space<vmem>>, %arg8: memref<1x8xf32, #tpu.memory_space<vmem>>, %arg9: memref<1x1x128xf32, #tpu.memory_space<vmem>>) attributes {dimension_semantics = [#tpu.dimension_semantics<parallel>], iteration_bounds = array<i64: 2>, scalar_prefetch = 0 : i64, scratch_operands = 0 : i64, tpu.core_type = #tpu.core_type<tc>, window_params = [{transform_indices = @transform_0, window_bounds = array<i64: 1, 8, 1>}, {transform_indices = @transform_1, window_bounds = array<i64: 1, 8, 8>}, {pipeline_mode = #tpu.pipeline_mode<synchronous>, transform_indices = @transform_2, window_bounds = array<i64: 1, 128>}, {pipeline_mode = #tpu.pipeline_mode<synchronous>, transform_indices = @transform_3, window_bounds = array<i64: 1, 128>}, {pipeline_mode = #tpu.pipeline_mode<synchronous>, transform_indices = @transform_4, window_bounds = array<i64: 1, 128>}, {pipeline_mode = #tpu.pipeline_mode<synchronous>, transform_indices = @transform_5, window_bounds = array<i64: 128, 128>}, {pipeline_mode = #tpu.pipeline_mode<synchronous>, transform_indices = @transform_6, window_bounds = array<i64: 1, 128>}, {pipeline_mode = #tpu.pipeline_mode<synchronous>, transform_indices = @transform_7, window_bounds = array<i64: 1, 8>}, {transform_indices = @transform_8, window_bounds = array<i64: 1, 1, 128>}]} {
    %c0 = arith.constant 0 : index
    %c0_0 = arith.constant 0 : index
    %c0_1 = arith.constant 0 : index
    %0 = vector.load %arg2[%c0, %c0_0, %c0_1] : memref<1x8x8xbf16, #tpu.memory_space<vmem>>, vector<1x8x8xbf16>
    %1 = vector.shape_cast %0 : vector<1x8x8xbf16> to vector<8x8xbf16>
    %c0_2 = arith.constant 0 : index
    %c0_3 = arith.constant 0 : index
    %c0_4 = arith.constant 0 : index
    %2 = vector.load %arg1[%c0_2, %c0_3, %c0_4] : memref<1x8x1xf32, #tpu.memory_space<vmem>>, vector<1x8x1xf32>
    %3 = vector.shape_cast %2 : vector<1x8x1xf32> to vector<8x1xf32>
    %c0_5 = arith.constant 0 : index
    %c0_6 = arith.constant 0 : index
    %4 = vector.load %arg3[%c0_5, %c0_6] : memref<1x128xf32, #tpu.memory_space<vmem>>, vector<1x128xf32>
    %5 = vector.broadcast %3 : vector<8x1xf32> to vector<8x128xf32>
    %6 = vector.broadcast %4 : vector<1x128xf32> to vector<8x128xf32>
    %7 = arith.mulf %5, %6 : vector<8x128xf32>
    %c0_7 = arith.constant 0 : index
    %c0_8 = arith.constant 0 : index
    %8 = vector.load %arg4[%c0_7, %c0_8] : memref<1x128xf32, #tpu.memory_space<vmem>>, vector<1x128xf32>
    %9 = vector.broadcast %8 : vector<1x128xf32> to vector<8x128xf32>
    %10 = arith.addf %7, %9 : vector<8x128xf32>
    %11 = arith.truncf %10 : vector<8x128xf32> to vector<8x128xbf16>
    %cst = arith.constant dense<0.000000e+00> : vector<8x128xf32>
    %12 = tpu.matmul %1, %11, %cst {dimension_numbers = #tpu.dot_dimension_numbers<[1], [0], [0], [1], [0, 0, 1, 1], [], []>} : vector<8x8xbf16>, vector<8x128xbf16>, vector<8x128xf32> -> vector<8x128xf32>
    %c0_9 = arith.constant 0 : index
    %c0_10 = arith.constant 0 : index
    %13 = vector.load %arg5[%c0_9, %c0_10] : memref<1x128xf32, #tpu.memory_space<vmem>>, vector<1x128xf32>
    %14 = vector.broadcast %13 : vector<1x128xf32> to vector<8x128xf32>
    %15 = arith.addf %12, %14 : vector<8x128xf32>
    %cst_11 = arith.constant 0.000000e+00 : f32
    %16 = vector.broadcast %cst_11 : f32 to vector<8x128xf32>
    %17 = arith.maximumf %15, %16 : vector<8x128xf32>
    %18 = arith.truncf %17 : vector<8x128xf32> to vector<8x128xbf16>
    %c0_12 = arith.constant 0 : index
    %c0_13 = arith.constant 0 : index
    %19 = vector.load %arg6[%c0_12, %c0_13] : memref<128x128xbf16, #tpu.memory_space<vmem>>, vector<128x128xbf16>
    %cst_14 = arith.constant dense<0.000000e+00> : vector<8x128xf32>
    %20 = tpu.matmul %18, %19, %cst_14 {dimension_numbers = #tpu.dot_dimension_numbers<[1], [0], [0], [1], [0, 0, 1, 1], [], []>} : vector<8x128xbf16>, vector<128x128xbf16>, vector<8x128xf32> -> vector<8x128xf32>
    %21 = arith.truncf %20 : vector<8x128xf32> to vector<8x128xbf16>
    %cst_15 = arith.constant dense<0.000000e+00> : vector<8x128xf32>
    %22 = tpu.matmul %1, %21, %cst_15 {dimension_numbers = #tpu.dot_dimension_numbers<[1], [0], [0], [1], [0, 0, 1, 1], [], []>} : vector<8x8xbf16>, vector<8x128xbf16>, vector<8x128xf32> -> vector<8x128xf32>
    %c0_16 = arith.constant 0 : index
    %c0_17 = arith.constant 0 : index
    %23 = vector.load %arg7[%c0_16, %c0_17] : memref<1x128xf32, #tpu.memory_space<vmem>>, vector<1x128xf32>
    %24 = vector.broadcast %23 : vector<1x128xf32> to vector<8x128xf32>
    %25 = arith.addf %22, %24 : vector<8x128xf32>
    %c0_18 = arith.constant 0 : index
    %c0_19 = arith.constant 0 : index
    %26 = vector.load %arg8[%c0_18, %c0_19] : memref<1x8xf32, #tpu.memory_space<vmem>>, vector<1x8xf32>
    %cst_20 = arith.constant dense<0.000000e+00> : vector<1x128xf32>
    %27 = tpu.matmul %26, %25, %cst_20 {dimension_numbers = #tpu.dot_dimension_numbers<[1], [0], [0], [1], [0, 0, 1, 1], [], []>} : vector<1x8xf32>, vector<8x128xf32>, vector<1x128xf32> -> vector<1x128xf32>
    %c0_21 = arith.constant 0 : index
    %c0_22 = arith.constant 0 : index
    %c0_23 = arith.constant 0 : index
    %28 = vector.load %arg9[%c0_21, %c0_22, %c0_23] : memref<1x1x128xf32, #tpu.memory_space<vmem>>, vector<1x1x128xf32>
    %29 = vector.shape_cast %28 : vector<1x1x128xf32> to vector<1x128xf32>
    %30 = vector.shape_cast %27 : vector<1x128xf32> to vector<1x1x128xf32>
    tpu.vector_store %arg9[%c0_21, %c0_22, %c0_23], %30 {strides = array<i32>} : memref<1x1x128xf32, #tpu.memory_space<vmem>>, vector<1x1x128xf32>,
    return
  }
  func.func @transform_0(%arg0: i32) -> (i32, i32, i32) {
    %c0_i32 = arith.constant 0 : i32
    %c0_i32_0 = arith.constant 0 : i32
    %c0_i32_1 = arith.constant 0 : i32
    return %arg0, %c0_i32, %c0_i32_0 : i32, i32, i32
  }
  func.func @transform_1(%arg0: i32) -> (i32, i32, i32) {
    %c0_i32 = arith.constant 0 : i32
    %c0_i32_0 = arith.constant 0 : i32
    %c0_i32_1 = arith.constant 0 : i32
    return %arg0, %c0_i32, %c0_i32_0 : i32, i32, i32
  }
  func.func @transform_2(%arg0: i32) -> (i32, i32) {
    %c0_i32 = arith.constant 0 : i32
    %c0_i32_0 = arith.constant 0 : i32
    %c0_i32_1 = arith.constant 0 : i32
    return %c0_i32, %c0_i32_0 : i32, i32
  }
  func.func @transform_3(%arg0: i32) -> (i32, i32) {
    %c0_i32 = arith.constant 0 : i32
    %c0_i32_0 = arith.constant 0 : i32
    %c0_i32_1 = arith.constant 0 : i32
    return %c0_i32, %c0_i32_0 : i32, i32
  }
  func.func @transform_4(%arg0: i32) -> (i32, i32) {
    %c0_i32 = arith.constant 0 : i32
    %c0_i32_0 = arith.constant 0 : i32
    %c0_i32_1 = arith.constant 0 : i32
    return %c0_i32, %c0_i32_0 : i32, i32
  }
  func.func @transform_5(%arg0: i32) -> (i32, i32) {
    %c0_i32 = arith.constant 0 : i32
    %c0_i32_0 = arith.constant 0 : i32
    %c0_i32_1 = arith.constant 0 : i32
    return %c0_i32, %c0_i32_0 : i32, i32
  }
  func.func @transform_6(%arg0: i32) -> (i32, i32) {
    %c0_i32 = arith.constant 0 : i32
    %c0_i32_0 = arith.constant 0 : i32
    %c0_i32_1 = arith.constant 0 : i32
    return %c0_i32, %c0_i32_0 : i32, i32
  }
  func.func @transform_7(%arg0: i32) -> (i32, i32) {
    %c0_i32 = arith.constant 0 : i32
    %c0_i32_0 = arith.constant 0 : i32
    %c0_i32_1 = arith.constant 0 : i32
    return %c0_i32, %c0_i32_0 : i32, i32
  }
  func.func @transform_8(%arg0: i32) -> (i32, i32, i32) {
    %c0_i32 = arith.constant 0 : i32
    %c0_i32_0 = arith.constant 0 : i32
    %c0_i32_1 = arith.constant 0 : i32
    return %arg0, %c0_i32, %c0_i32_0 : i32, i32, i32
  }
}

</mosaic_0001>

<llo_original>
// kernel: protein_branch_gnn.1
$region0: #{protein_branch_gnn.1}
  #allocation0 [shape = 'u32[]', space=smem, size = 0x4, offset = 0x4, fixed_abs, tag = 'smem constant byte address 0x4 - core index']
  #allocation1 [shape = 'u32[144,128]{1,0:T(1,128)}', space=vmem, size = 0x12000, scoped, tag = 'internal scratch']
  %s0 = inlined_call_operand.vmem [shape: f32[2,8,1], index: 0, kind: input, shape index: {}]
  %s1 = inlined_call_operand.vmem [shape: bf16[2,8,8], index: 1, kind: input, shape index: {}]
  %s2 = inlined_call_operand.vmem [shape: f32[1,128], index: 2, kind: input, shape index: {}]
  %s3 = inlined_call_operand.vmem [shape: f32[1,128], index: 3, kind: input, shape index: {}]
  %s4 = inlined_call_operand.vmem [shape: f32[1,128], index: 4, kind: input, shape index: {}]
  %s5 = inlined_call_operand.vmem [shape: bf16[128,128], index: 5, kind: input, shape index: {}]
  %s6 = inlined_call_operand.vmem [shape: f32[1,128], index: 6, kind: input, shape index: {}]
  %s7 = inlined_call_operand.vmem [shape: f32[1,8], index: 7, kind: input, shape index: {}]
  %s8 = inlined_call_operand.hbm [shape: f32[2,1,128], index: 8, kind: output, shape index: {}]
  %s9 = sld [smem:[#allocation0]]
  $region65: #{protein_branch_gnn.1} parent=0
    _
  %s11 = ssub.s32 1, %s9
  %s12 = scalar_select 0, %s11, %s9
  $region1: #{protein_branch_gnn.1} parent=0
    #allocation2 [shape = 'u8[1024]{0}', space=vmem, size = 0x400, scoped, tag = 'output window, operand 0']
    #allocation3 [shape = 's32[2]{0}', space=sflag, size = 0x8, scoped, tag = 'scoped memory for protein_branch_gnn.1']
    %13 = vsyncpa [#allocation3], 0
    %s14 = scalar_lea.sflag [#allocation3], 1
    %15 = vsyncpa %s14, 0
    loop: start=0, step=1, limit=4
    $region2: #{protein_branch_gnn.1} parent=1 // loop_pre_header
      _
    $region3: #{protein_branch_gnn.1} parent=1 // loop_header
      %s17 = sphi 0, %s21
      %p18 = scmp.ge.s32.totalorder %s17, 4
      %s27 = sphi 0, %s29
      %s30 = sphi 0, %s27
      %s31 = sphi 0, %s30
      %s47 = sphi 0, %s31
      %s53 = sphi 0, %s55
      %s56 = sphi 0, %s53
      %s57 = sphi 0, %s56
      %s73 = sphi 0, %s57
      %s77 = sphi 0, %s77
      %s79 = sphi 0, %s77
      %s80 = sphi 0, %s79
      %s94 = sphi 0, %s80
      %s98 = sphi 0, %s98
      %s100 = sphi 0, %s98
      %s101 = sphi 0, %s100
      %s115 = sphi 0, %s101
      %s119 = sphi 0, %s119
      %s121 = sphi 0, %s119
      %s122 = sphi 0, %s121
      %s136 = sphi 0, %s122
      %s140 = sphi 0, %s140
      %s142 = sphi 0, %s140
      %s143 = sphi 0, %s142
      %s157 = sphi 0, %s143
      %s161 = sphi 0, %s161
      %s163 = sphi 0, %s161
      %s164 = sphi 0, %s163
      %s178 = sphi 0, %s164
      %s182 = sphi 0, %s182
      %s184 = sphi 0, %s182
      %s185 = sphi 0, %s184
      %s199 = sphi 0, %s185
      %s205 = sphi 0, %s207
      %s208 = sphi 0, %s205
      %s209 = sphi 0, %s208
      %s225 = sphi 0, %s209
    $region4: #{protein_branch_gnn.1} parent=1 // loop_header_branch
      %20 = sbr.rel (%p18) target = $region8
    $region5: #{protein_branch_gnn.1} parent=1 // loop_body
      %s22 = ssub.s32 %s17, 1
      %s23 = ssub.s32 %s17, 2
      %s24 = sadd.s32 %s17, 1
      %s25 = ssub.s32 %s17, %s24
      %p26 = scmp.eq.s32.totalorder %s25, 0
      %s28 = sadd.s32 %s27, 1
      %s29 = scalar_select %p26, %s27, %s28
      %p32 = pneg %p26
      %p33 = scmp.eq.s32.totalorder %s17, 1
      %p34 = por %p32, %p33
      %p35 = scmp.ne.s32.totalorder %s27, %s30
      %p36 = scmp.eq.s32.totalorder %s17, 0
      %p37 = por %p35, %p36
      %p38 = scmp.ne.s32.totalorder %s27, %s30
      %p39 = scmp.eq.s32.totalorder %s22, 1
      %p40 = por %p38, %p39
      %p41 = scmp.ne.s32.totalorder %s30, %s31
      %p42 = scmp.eq.s32.totalorder %s22, 0
      %p43 = por %p41, %p42
      %p44 = scmp.ne.s32.totalorder %s30, %s31
      %p45 = scmp.eq.s32.totalorder %s23, 1
      %p46 = por %p44, %p45
      %p48 = scmp.ne.s32.totalorder %s31, %s47
      %p49 = scmp.eq.s32.totalorder %s23, 0
      %p50 = por %p48, %p49
      %s51 = ssub.s32 %s17, %s24
      %p52 = scmp.eq.s32.totalorder %s51, 0
      %s54 = sadd.s32 %s53, 1
      %s55 = scalar_select %p52, %s53, %s54
      %p58 = pneg %p52
      %p59 = scmp.eq.s32.totalorder %s17, 1
      %p60 = por %p58, %p59
      %p61 = scmp.ne.s32.totalorder %s53, %s56
      %p62 = scmp.eq.s32.totalorder %s17, 0
      %p63 = por %p61, %p62
      %p64 = scmp.ne.s32.totalorder %s53, %s56
      %p65 = scmp.eq.s32.totalorder %s22, 1
      %p66 = por %p64, %p65
      %p67 = scmp.ne.s32.totalorder %s56, %s57
      %p68 = scmp.eq.s32.totalorder %s22, 0
      %p69 = por %p67, %p68
      %p70 = scmp.ne.s32.totalorder %s56, %s57
      %p71 = scmp.eq.s32.totalorder %s23, 1
      %p72 = por %p70, %p71
      %p74 = scmp.ne.s32.totalorder %s57, %s73
      %p75 = scmp.eq.s32.totalorder %s23, 0
      %p76 = por %p74, %p75
      %s78 = sadd.s32 %s77, 1
      %p81 = scmp.eq.s32.totalorder %s17, 1
      %p82 = scmp.ne.s32.totalorder %s77, %s79
      %p83 = scmp.eq.s32.totalorder %s17, 0
      %p84 = por %p82, %p83
      %p85 = scmp.ne.s32.totalorder %s77, %s79
      %p86 = scmp.eq.s32.totalorder %s22, 1
      %p87 = por %p85, %p86
      %p88 = scmp.ne.s32.totalorder %s79, %s80
      %p89 = scmp.eq.s32.totalorder %s22, 0
      %p90 = por %p88, %p89
      %p91 = scmp.ne.s32.totalorder %s79, %s80
      %p92 = scmp.eq.s32.totalorder %s23, 1
      %p93 = por %p91, %p92
      %p95 = scmp.ne.s32.totalorder %s80, %s94
      %p96 = scmp.eq.s32.totalorder %s23, 0
      %p97 = por %p95, %p96
      %s99 = sadd.s32 %s98, 1
      %p102 = scmp.eq.s32.totalorder %s17, 1
      %p103 = scmp.ne.s32.totalorder %s98, %s100
      %p104 = scmp.eq.s32.totalorder %s17, 0
      %p105 = por %p103, %p104
      %p106 = scmp.ne.s32.totalorder %s98, %s100
      %p107 = scmp.eq.s32.totalorder %s22, 1
      %p108 = por %p106, %p107
      %p109 = scmp.ne.s32.totalorder %s100, %s101
      %p110 = scmp.eq.s32.totalorder %s22, 0
      %p111 = por %p109, %p110
      %p112 = scmp.ne.s32.totalorder %s100, %s101
      %p113 = scmp.eq.s32.totalorder %s23, 1
      %p114 = por %p112, %p113
      %p116 = scmp.ne.s32.totalorder %s101, %s115
      %p117 = scmp.eq.s32.totalorder %s23, 0
      %p118 = por %p116, %p117
      %s120 = sadd.s32 %s119, 1
      %p123 = scmp.eq.s32.totalorder %s17, 1
      %p124 = scmp.ne.s32.totalorder %s119, %s121
      %p125 = scmp.eq.s32.totalorder %s17, 0
      %p126 = por %p124, %p125
      %p127 = scmp.ne.s32.totalorder %s119, %s121
      %p128 = scmp.eq.s32.totalorder %s22, 1
      %p129 = por %p127, %p128
      %p130 = scmp.ne.s32.totalorder %s121, %s122
      %p131 = scmp.eq.s32.totalorder %s22, 0
      %p132 = por %p130, %p131
      %p133 = scmp.ne.s32.totalorder %s121, %s122
      %p134 = scmp.eq.s32.totalorder %s23, 1
      %p135 = por %p133, %p134
      %p137 = scmp.ne.s32.totalorder %s122, %s136
      %p138 = scmp.eq.s32.totalorder %s23, 0
      %p139 = por %p137, %p138
      %s141 = sadd.s32 %s140, 1
      %p144 = scmp.eq.s32.totalorder %s17, 1
      %p145 = scmp.ne.s32.totalorder %s140, %s142
      %p146 = scmp.eq.s32.totalorder %s17, 0
      %p147 = por %p145, %p146
      %p148 = scmp.ne.s32.totalorder %s140, %s142
      %p149 = scmp.eq.s32.totalorder %s22, 1
      %p150 = por %p148, %p149
      %p151 = scmp.ne.s32.totalorder %s142, %s143
      %p152 = scmp.eq.s32.totalorder %s22, 0
      %p153 = por %p151, %p152
      %p154 = scmp.ne.s32.totalorder %s142, %s143
      %p155 = scmp.eq.s32.totalorder %s23, 1
      %p156 = por %p154, %p155
      %p158 = scmp.ne.s32.totalorder %s143, %s157
      %p159 = scmp.eq.s32.totalorder %s23, 0
      %p160 = por %p158, %p159
      %s162 = sadd.s32 %s161, 1
      %p165 = scmp.eq.s32.totalorder %s17, 1
      %p166 = scmp.ne.s32.totalorder %s161, %s163
      %p167 = scmp.eq.s32.totalorder %s17, 0
      %p168 = por %p166, %p167
      %p169 = scmp.ne.s32.totalorder %s161, %s163
      %p170 = scmp.eq.s32.totalorder %s22, 1
      %p171 = por %p169, %p170
      %p172 = scmp.ne.s32.totalorder %s163, %s164
      %p173 = scmp.eq.s32.totalorder %s22, 0
      %p174 = por %p172, %p173
      %p175 = scmp.ne.s32.totalorder %s163, %s164
      %p176 = scmp.eq.s32.totalorder %s23, 1
      %p177 = por %p175, %p176
      %p179 = scmp.ne.s32.totalorder %s164, %s178
      %p180 = scmp.eq.s32.totalorder %s23, 0
      %p181 = por %p179, %p180
      %s183 = sadd.s32 %s182, 1
      %p186 = scmp.eq.s32.totalorder %s17, 1
      %p187 = scmp.ne.s32.totalorder %s182, %s184
      %p188 = scmp.eq.s32.totalorder %s17, 0
      %p189 = por %p187, %p188
      %p190 = scmp.ne.s32.totalorder %s182, %s184
      %p191 = scmp.eq.s32.totalorder %s22, 1
      %p192 = por %p190, %p191
      %p193 = scmp.ne.s32.totalorder %s184, %s185
      %p194 = scmp.eq.s32.totalorder %s22, 0
      %p195 = por %p193, %p194
      %p196 = scmp.ne.s32.totalorder %s184, %s185
      %p197 = scmp.eq.s32.totalorder %s23, 1
      %p198 = por %p196, %p197
      %p200 = scmp.ne.s32.totalorder %s185, %s199
      %p201 = scmp.eq.s32.totalorder %s23, 0
      %p202 = por %p200, %p201
      %s203 = ssub.s32 %s17, %s24
      %p204 = scmp.eq.s32.totalorder %s203, 0
      %s206 = sadd.s32 %s205, 1
      %s207 = scalar_select %p204, %s205, %s206
      %p210 = pneg %p204
      %p211 = scmp.eq.s32.totalorder %s17, 1
      %p212 = por %p210, %p211
      %p213 = scmp.ne.s32.totalorder %s205, %s208
      %p214 = scmp.eq.s32.totalorder %s17, 0
      %p215 = por %p213, %p214
      %p216 = scmp.ne.s32.totalorder %s205, %s208
      %p217 = scmp.eq.s32.totalorder %s22, 1
      %p218 = por %p216, %p217
      %p219 = scmp.ne.s32.totalorder %s208, %s209
      %p220 = scmp.eq.s32.totalorder %s22, 0
      %p221 = por %p219, %p220
      %p222 = scmp.ne.s32.totalorder %s208, %s209
      %p223 = scmp.eq.s32.totalorder %s23, 1
      %p224 = por %p222, %p223
      %p226 = scmp.ne.s32.totalorder %s209, %s225
      %p227 = scmp.eq.s32.totalorder %s23, 0
      %p228 = por %p226, %p227
      %p229 = scmp.le.s32.totalorder 1, %s17
      %p230 = scmp.lt.s32.totalorder %s17, 3
      %p231 = pnand %p229, %p230
      %p232 = pneg %p231
      // Predicated region
      $region9: #{protein_branch_gnn.1} parent=5 // pred_check
        _
      $region10: #{protein_branch_gnn.1} parent=5 // pred_check_branch
        %234 = sbr.rel (%p231) target = $region12
      $region11: #{protein_branch_gnn.1} parent=5 // pred_region
        %s235 = ssub.s32 %s17, 1
        // Predicated region
        $region13: #{protein_branch_gnn.1} parent=11 // pred_check
          %p236 = pneg %p90
        $region14: #{protein_branch_gnn.1} parent=11 // pred_check_branch
          %238 = sbr.rel (%p236) target = $region16
        $region15: #{protein_branch_gnn.1} parent=11 // pred_region
          _
        $region16: #{protein_branch_gnn.1} parent=11 // pred_fallthru
          _
        // Predicated region
        $region17: #{protein_branch_gnn.1} parent=11 // pred_check
          %p239 = pneg %p111
        $region18: #{protein_branch_gnn.1} parent=11 // pred_check_branch
          %241 = sbr.rel (%p239) target = $region20
        $region19: #{protein_branch_gnn.1} parent=11 // pred_region
          _
        $region20: #{protein_branch_gnn.1} parent=11 // pred_fallthru
          _
        // Predicated region
        $region21: #{protein_branch_gnn.1} parent=11 // pred_check
          %p242 = pneg %p132
        $region22: #{protein_branch_gnn.1} parent=11 // pred_check_branch
          %244 = sbr.rel (%p242) target = $region24
        $region23: #{protein_branch_gnn.1} parent=11 // pred_region
          _
        $region24: #{protein_branch_gnn.1} parent=11 // pred_fallthru
          _
        // Predicated region
        $region25: #{protein_branch_gnn.1} parent=11 // pred_check
          %p245 = pneg %p153
        $region26: #{protein_branch_gnn.1} parent=11 // pred_check_branch
          %247 = sbr.rel (%p245) target = $region28
        $region27: #{protein_branch_gnn.1} parent=11 // pred_region
          _
        $region28: #{protein_branch_gnn.1} parent=11 // pred_fallthru
          _
        // Predicated region
        $region29: #{protein_branch_gnn.1} parent=11 // pred_check
          %p248 = pneg %p174
        $region30: #{protein_branch_gnn.1} parent=11 // pred_check_branch
          %250 = sbr.rel (%p248) target = $region32
        $region31: #{protein_branch_gnn.1} parent=11 // pred_region
          _
        $region32: #{protein_branch_gnn.1} parent=11 // pred_fallthru
          _
        // Predicated region
        $region33: #{protein_branch_gnn.1} parent=11 // pred_check
          %p251 = pneg %p195
        $region34: #{protein_branch_gnn.1} parent=11 // pred_check_branch
          %253 = sbr.rel (%p251) target = $region36
        $region35: #{protein_branch_gnn.1} parent=11 // pred_region
          _
        $region36: #{protein_branch_gnn.1} parent=11 // pred_fallthru
          _
      $region12: #{protein_branch_gnn.1} parent=5 // pred_fallthru
        _
      %p254 = scmp.lt.s32.totalorder %s17, 2
      // Predicated region
      $region37: #{protein_branch_gnn.1} parent=5 // pred_check
        %p255 = pneg %p254
      $region38: #{protein_branch_gnn.1} parent=5 // pred_check_branch
        %257 = sbr.rel (%p255) target = $region40
      $region39: #{protein_branch_gnn.1} parent=5 // pred_region
        // Predicated region
        $region41: #{protein_branch_gnn.1} parent=39 // pred_check
          %p258 = pneg %p37
        $region42: #{protein_branch_gnn.1} parent=39 // pred_check_branch
          %260 = sbr.rel (%p258) target = $region44
        $region43: #{protein_branch_gnn.1} parent=39 // pred_region
          %p261 = scmp.lt.s32.totalorder %s17, 1
          %s262 = scalar_select %p261, %s17, 1
          %s263 = smul.addr %s262, 8
          %s264 = scalar_lea.vmem %s0, %s263
        $region44: #{protein_branch_gnn.1} parent=39 // pred_fallthru
          _
        // Predicated region
        $region45: #{protein_branch_gnn.1} parent=39 // pred_check
          %p265 = pneg %p63
        $region46: #{protein_branch_gnn.1} parent=39 // pred_check_branch
          %267 = sbr.rel (%p265) target = $region48
        $region47: #{protein_branch_gnn.1} parent=39 // pred_region
          %p268 = scmp.lt.s32.totalorder %s17, 1
          %s269 = scalar_select %p268, %s17, 1
          %s270 = smul.addr %s269, 4
          %s271 = scalar_lea.vmem %s1, %s270
        $region48: #{protein_branch_gnn.1} parent=39 // pred_fallthru
          _
      $region40: #{protein_branch_gnn.1} parent=5 // pred_fallthru
        _
      %p272 = scmp.le.s32.totalorder 1, %s17
      %p273 = scmp.lt.s32.totalorder %s17, 3
      %p274 = pnand %p272, %p273
      %p275 = pneg %p274
      // Predicated region
      $region49: #{protein_branch_gnn.1} parent=5 // pred_check
        _
      $region50: #{protein_branch_gnn.1} parent=5 // pred_check_branch
        %277 = sbr.rel (%p274) target = $region52
      $region51: #{protein_branch_gnn.1} parent=5 // pred_region
        %s278 = ssub.s32 %s17, 1
        %p279 = scmp.lt.s32.totalorder %s22, 1
        %s280 = scalar_select %p279, %s22, 1
        %s281 = smul.addr %s280, 8
        %s282 = scalar_lea.vmem %s0, %s281
        %p283 = pneg %p43
        %p284 = pneg %p40
        %p285 = scmp.lt.s32.totalorder %s22, 1
        %s286 = scalar_select %p285, %s22, 1
        %s287 = smul.addr %s286, 4
        %s288 = scalar_lea.vmem %s1, %s287
        %p289 = pneg %p69
        %p290 = pneg %p66
        %p291 = pneg %p90
        %p292 = pneg %p87
        %p293 = pneg %p111
        %p294 = pneg %p108
        %p295 = pneg %p132
        %p296 = pneg %p129
        %p297 = pneg %p153
        %p298 = pneg %p150
        %p299 = pneg %p174
        %p300 = pneg %p171
        %p301 = pneg %p195
        %p302 = pneg %p192
        %p303 = pneg %p221
        %p304 = pneg %p218
        %s305 = sand.u32 %s208, 1
        %s306 = scalar_lea.sflag [#allocation3], %s305
        %s307 = sand.u32 %s208, 1
        %s308 = scalar_lea.vmem [#allocation2], %s307
        %p309 = scmp.lt.s32.totalorder %s22, 1
        %s310 = scalar_select %p309, %s22, 1
        %s311 = smul.addr %s310, 8
        %s312 = scalar_lea.vmem %s0, %s311
        %p313 = scmp.lt.s32.totalorder %s22, 1
        %s314 = scalar_select %p313, %s22, 1
        %s315 = smul.addr %s314, 4
        %s316 = scalar_lea.vmem %s1, %s315
        %v318 = vld [vmem:[%s316] sm:$0xf]
        %v319 = vld [vmem:[%s312] sm:$0xff]
        %v320 = vld [vmem:[%s2] sm:$0x1]
        %322 = vset.pattern.permute.xlu0 0
        %323 = vperm.xlu0 %322, %v319
        %v324 = vpop.permute.xlu0 %323
        %v327 = vlaneseq
        %v328 = vshrl.u32 %v327, 7
        %v329 = vsub.s32 0, %v328
        %v330 = vrot.slane %v320, %v329
        %v332 = vmul.f32 %v324, %v330
        %v333 = vld [vmem:[%s3] sm:$0x1]
        %v335 = vlaneseq
        %v336 = vshrl.u32 %v335, 7
        %v337 = vsub.s32 0, %v336
        %v338 = vrot.slane %v333, %v337
        %v340 = vadd.f32 %v332, %v338
        %v341 = vpack.c.bf16 %v340, %v340
        %v342 = vld [vmem:[%s4] sm:$0x1]
        %v344 = vlaneseq
        %v345 = vshrl.u32 %v344, 7
        %v346 = vsub.s32 0, %v345
        %v347 = vrot.slane %v342, %v346
        %vm349 = vcmask 64512
        %v351 = vsel %vm349, %v318, 0
        %vm353 = vcmask 1043456
        %v355 = vsel %vm353, %v341, 0
        %357 = vmatprep.subr.bf16.mxu0 0
        %358 = vmatpush1.bf16.msra.mxu0 0
        %359 = vmatprep.subr.bf16.mxu0 0
        %360 = vmatpush1.bf16.msra.mxu0 0
        %361 = vmatprep.subr.bf16.mxu0 0
        %362 = vmatpush1.bf16.msra.mxu0 0
        %363 = vmatprep.subr.bf16.mxu0 0
        %364 = vmatpush1.bf16.msra.mxu0 0
        %365 = vmatprep.subr.bf16.mxu0 0
        %366 = vmatpush1.bf16.msra.mxu0 0
        %367 = vmatprep.subr.bf16.mxu0 0
        %368 = vmatpush1.bf16.msra.mxu0 0
        %369 = vmatprep.subr.bf16.mxu0 0
        %370 = vmatpush1.bf16.msra.mxu0 0
        %371 = vmatprep.subr.bf16.mxu0 0
        %372 = vmatpush1.bf16.msra.mxu0 %v355
        %373 = vmatprep.subr.bf16.mxu0 0
        %374 = vmatpush2.bf16.msra.mxu0 0
        %375 = vmatprep.subr.bf16.mxu0 0
        %376 = vmatpush2.bf16.msra.mxu0 0
        %377 = vmatprep.subr.bf16.mxu0 0
        %378 = vmatpush2.bf16.msra.mxu0 0
        %379 = vmatprep.subr.bf16.mxu0 0
        %380 = vmatpush2.bf16.msra.mxu0 0
        %381 = vmatprep.subr.bf16.mxu0 0
        %382 = vmatpush2.bf16.msra.mxu0 0
        %383 = vmatprep.subr.bf16.mxu0 0
        %384 = vmatpush2.bf16.msra.mxu0 0
        %385 = vmatprep.subr.bf16.mxu0 0
        %386 = vmatpush2.bf16.msra.mxu0 0
        %387 = vmatprep.subr.bf16.mxu0 0
        %388 = vmatpush2.bf16.msra.mxu0 0
        %389 = vmatprep.mubr.bf16.mxu0 0
        %390 = vmatmul.mubr.bf16.gmra.mxu0 %v351
        %v391 = vpop.f32.mrf.mxu0
        %v392 = vadd.f32 %v347, %v391
        %v393 = vpop.f32.mrf.mxu0
        %v394 = vpop.f32.mrf.mxu0
        %v395 = vpop.f32.mrf.mxu0
        %396 = vdwg.mxu0
        %v397 = vmax.f32 %v392, 0.0
        %v398 = vpack.c.bf16 %v397, %v397
        %v399 = vld [vmem:[%s5] sm:$0xf]
        %v400 = vld [vmem:[%s5 + $0x4] sm:$0xf]
        %v401 = vld [vmem:[%s5 + $0x8] sm:$0xf]
        %v402 = vld [vmem:[%s5 + $0xc] sm:$0xf]
        %v403 = vld [vmem:[%s5 + $0x10] sm:$0xf]
        %v404 = vld [vmem:[%s5 + $0x14] sm:$0xf]
        %v405 = vld [vmem:[%s5 + $0x18] sm:$0xf]
        %v406 = vld [vmem:[%s5 + $0x1c] sm:$0xf]
        %v407 = vld [vmem:[%s5 + $0x20] sm:$0xf]
        %v408 = vld [vmem:[%s5 + $0x24] sm:$0xf]
        %v409 = vld [vmem:[%s5 + $0x28] sm:$0xf]
        %v410 = vld [vmem:[%s5 + $0x2c] sm:$0xf]
        %v411 = vld [vmem:[%s5 + $0x30] sm:$0xf]
        %v412 = vld [vmem:[%s5 + $0x34] sm:$0xf]
        %v413 = vld [vmem:[%s5 + $0x38] sm:$0xf]
        %v414 = vld [vmem:[%s5 + $0x3c] sm:$0xf]
        %v431 = vunpack.c.l.b16 %v399
        %v432 = vunpack.c.l.b16 %v400
        %v433 = vunpack.c.l.b16 %v401
        %v434 = vunpack.c.l.b16 %v402
        %v435 = vunpack.c.l.b16 %v403
        %v436 = vunpack.c.l.b16 %v404
        %v437 = vunpack.c.l.b16 %v405
        %v438 = vunpack.c.l.b16 %v406
        %v439 = vunpack.c.l.b16 %v407
        %v440 = vunpack.c.l.b16 %v408
        %v441 = vunpack.c.l.b16 %v409
        %v442 = vunpack.c.l.b16 %v410
        %v443 = vunpack.c.l.b16 %v411
        %v444 = vunpack.c.l.b16 %v412
        %v445 = vunpack.c.l.b16 %v413
        %v446 = vunpack.c.l.b16 %v414
        %v447 = vpack.c.b16 %v432, %v431
        %v448 = vpack.c.b16 %v434, %v433
        %v449 = vpack.c.b16 %v436, %v435
        %v450 = vpack.c.b16 %v438, %v437
        %v451 = vpack.c.b16 %v440, %v439
        %v452 = vpack.c.b16 %v442, %v441
        %v453 = vpack.c.b16 %v444, %v443
        %v454 = vpack.c.b16 %v446, %v445
        %463 = vmatprep.subr.bf16.mxu0 0
        %464 = vmatpush1.bf16.msra.mxu0 %v454
        %465 = vmatprep.subr.bf16.mxu0 0
        %466 = vmatpush1.bf16.msra.mxu0 %v453
        %467 = vmatprep.subr.bf16.mxu0 0
        %468 = vmatpush1.bf16.msra.mxu0 %v452
        %469 = vmatprep.subr.bf16.mxu0 0
        %470 = vmatpush1.bf16.msra.mxu0 %v451
        %471 = vmatprep.subr.bf16.mxu0 0
        %472 = vmatpush1.bf16.msra.mxu0 %v450
        %473 = vmatprep.subr.bf16.mxu0 0
        %474 = vmatpush1.bf16.msra.mxu0 %v449
        %475 = vmatprep.subr.bf16.mxu0 0
        %476 = vmatpush1.bf16.msra.mxu0 %v448
        %477 = vmatprep.subr.bf16.mxu0 0
        %478 = vmatpush1.bf16.msra.mxu0 %v447
        %479 = vmatprep.subr.bf16.mxu0 0
        %480 = vmatpush2.bf16.msra.mxu0 0
        %481 = vmatprep.subr.bf16.mxu0 0
        %482 = vmatpush2.bf16.msra.mxu0 0
        %483 = vmatprep.subr.bf16.mxu0 0
        %484 = vmatpush2.bf16.msra.mxu0 0
        %485 = vmatprep.subr.bf16.mxu0 0
        %486 = vmatpush2.bf16.msra.mxu0 0
        %487 = vmatprep.subr.bf16.mxu0 0
        %488 = vmatpush2.bf16.msra.mxu0 0
        %489 = vmatprep.subr.bf16.mxu0 0
        %490 = vmatpush2.bf16.msra.mxu0 0
        %491 = vmatprep.subr.bf16.mxu0 0
        %492 = vmatpush2.bf16.msra.mxu0 0
        %493 = vmatprep.subr.bf16.mxu0 0
        %494 = vmatpush2.bf16.msra.mxu0 0
        %495 = vmatprep.mubr.bf16.mxu0 0
        %496 = vmatmul.mubr.bf16.gmra.mxu0 %v398
        %v497 = vpop.f32.mrf.mxu0
        %v498 = vadd.f32 0.0, %v497
        %v499 = vpop.f32.mrf.mxu0
        %v500 = vpop.f32.mrf.mxu0
        %v501 = vpop.f32.mrf.mxu0
        %502 = vdwg.mxu0
        %v503 = vpack.c.bf16 %v498, %v498
        %v504 = vld [vmem:[%s6] sm:$0x1]
        %v506 = vlaneseq
        %v507 = vshrl.u32 %v506, 7
        %v508 = vsub.s32 0, %v507
        %v509 = vrot.slane %v504, %v508
        %v512 = vsel %vm353, %v503, 0
        %514 = vmatprep.subr.bf16.mxu0 0
        %515 = vmatpush1.bf16.msra.mxu0 0
        %516 = vmatprep.subr.bf16.mxu0 0
        %517 = vmatpush1.bf16.msra.mxu0 0
        %518 = vmatprep.subr.bf16.mxu0 0
        %519 = vmatpush1.bf16.msra.mxu0 0
        %520 = vmatprep.subr.bf16.mxu0 0
        %521 = vmatpush1.bf16.msra.mxu0 0
        %522 = vmatprep.subr.bf16.mxu0 0
        %523 = vmatpush1.bf16.msra.mxu0 0
        %524 = vmatprep.subr.bf16.mxu0 0
        %525 = vmatpush1.bf16.msra.mxu0 0
        %526 = vmatprep.subr.bf16.mxu0 0
        %527 = vmatpush1.bf16.msra.mxu0 0
        %528 = vmatprep.subr.bf16.mxu0 0
        %529 = vmatpush1.bf16.msra.mxu0 %v512
        %530 = vmatprep.subr.bf16.mxu0 0
        %531 = vmatpush2.bf16.msra.mxu0 0
        %532 = vmatprep.subr.bf16.mxu0 0
        %533 = vmatpush2.bf16.msra.mxu0 0
        %534 = vmatprep.subr.bf16.mxu0 0
        %535 = vmatpush2.bf16.msra.mxu0 0
        %536 = vmatprep.subr.bf16.mxu0 0
        %537 = vmatpush2.bf16.msra.mxu0 0
        %538 = vmatprep.subr.bf16.mxu0 0
        %539 = vmatpush2.bf16.msra.mxu0 0
        %540 = vmatprep.subr.bf16.mxu0 0
        %541 = vmatpush2.bf16.msra.mxu0 0
        %542 = vmatprep.subr.bf16.mxu0 0
        %543 = vmatpush2.bf16.msra.mxu0 0
        %544 = vmatprep.subr.bf16.mxu0 0
        %545 = vmatpush2.bf16.msra.mxu0 0
        %546 = vmatprep.mubr.bf16.mxu0 0
        %547 = vmatmul.mubr.bf16.gmra.mxu0 %v351
        %v548 = vpop.f32.mrf.mxu0
        %v549 = vadd.f32 %v509, %v548
        %v550 = vpop.f32.mrf.mxu0
        %v551 = vpop.f32.mrf.mxu0
        %v552 = vpop.f32.mrf.mxu0
        %553 = vdwg.mxu0
        %v554 = vld [vmem:[%s7] sm:$0x1]
        %v556 = vsel %vm349, %v554, 0
        %558 = vmatprep.subr.mxu0 0.0
        %559 = vmatpush1.msra.mxu0 0.0
        %560 = vmatprep.subr.mxu0 0.0
        %561 = vmatpush1.msra.mxu0 0.0
        %562 = vmatprep.subr.mxu0 0.0
        %563 = vmatpush1.msra.mxu0 0.0
        %564 = vmatprep.subr.mxu0 0.0
        %565 = vmatpush1.msra.mxu0 0.0
        %566 = vmatprep.subr.mxu0 0.0
        %567 = vmatpush1.msra.mxu0 0.0
        %568 = vmatprep.subr.mxu0 0.0
        %569 = vmatpush1.msra.mxu0 0.0
        %570 = vmatprep.subr.mxu0 0.0
        %571 = vmatpush1.msra.mxu0 0.0
        %572 = vmatprep.subr.mxu0 0.0
        %573 = vmatpush1.msra.mxu0 0.0
        %574 = vmatprep.subr.mxu0 0.0
        %575 = vmatpush1.msra.mxu0 0.0
        %576 = vmatprep.subr.mxu0 0.0
        %577 = vmatpush1.msra.mxu0 0.0
        %578 = vmatprep.subr.mxu0 0.0
        %579 = vmatpush1.msra.mxu0 0.0
        %580 = vmatprep.subr.mxu0 0.0
        %581 = vmatpush1.msra.mxu0 0.0
        %582 = vmatprep.subr.mxu0 0.0
        %583 = vmatpush1.msra.mxu0 0.0
        %584 = vmatprep.subr.mxu0 0.0
        %585 = vmatpush1.msra.mxu0 0.0
        %586 = vmatprep.subr.mxu0 0.0
        %587 = vmatpush1.msra.mxu0 0.0
        %588 = vmatprep.subr.mxu0 0.0
        %589 = vmatpush1.msra.mxu0 %v549
        %590 = vmatprep.subr.mxu0 0.0
        %591 = vmatpush2.msra.mxu0 0.0
        %592 = vmatprep.subr.mxu0 0.0
        %593 = vmatpush2.msra.mxu0 0.0
        %594 = vmatprep.subr.mxu0 0.0
        %595 = vmatpush2.msra.mxu0 0.0
        %596 = vmatprep.subr.mxu0 0.0
        %597 = vmatpush2.msra.mxu0 0.0
        %598 = vmatprep.subr.mxu0 0.0
        %599 = vmatpush2.msra.mxu0 0.0
        %600 = vmatprep.subr.mxu0 0.0
        %601 = vmatpush2.msra.mxu0 0.0
        %602 = vmatprep.subr.mxu0 0.0
        %603 = vmatpush2.msra.mxu0 0.0
        %604 = vmatprep.subr.mxu0 0.0
        %605 = vmatpush2.msra.mxu0 0.0
        %606 = vmatprep.subr.mxu0 0.0
        %607 = vmatpush2.msra.mxu0 0.0
        %608 = vmatprep.subr.mxu0 0.0
        %609 = vmatpush2.msra.mxu0 0.0
        %610 = vmatprep.subr.mxu0 0.0
        %611 = vmatpush2.msra.mxu0 0.0
        %612 = vmatprep.subr.mxu0 0.0
        %613 = vmatpush2.msra.mxu0 0.0
        %614 = vmatprep.subr.mxu0 0.0
        %615 = vmatpush2.msra.mxu0 0.0
        %616 = vmatprep.subr.mxu0 0.0
        %617 = vmatpush2.msra.mxu0 0.0
        %618 = vmatprep.subr.mxu0 0.0
        %619 = vmatpush2.msra.mxu0 0.0
        %620 = vmatprep.subr.mxu0 0.0
        %621 = vmatpush2.msra.mxu0 0.0
        %622 = vmatprep.mubr.f32.mxu0 0.0
        %623 = vmatmul.mubr.f32.gmra.mxu0 %v556
        %v624 = vpop.f32.mrf.mxu0
        %v625 = vadd.f32 0.0, %v624
        %v626 = vpop.f32.mrf.mxu0
        %627 = vdwg.mxu0
        %628 = vst [vmem:[%s308] sm:$0x1] %v625
        %s629 = sand.u32 %s208, 1
        %s630 = scalar_lea.sflag [#allocation3], %s629
        %s631 = sand.u32 %s208, 1
        %s632 = scalar_lea.vmem [#allocation2], %s631
        // Predicated region
        $region53: #{protein_branch_gnn.1} parent=51 // pred_check
          %p633 = pneg %p218
        $region54: #{protein_branch_gnn.1} parent=51 // pred_check_branch
          %635 = sbr.rel (%p633) target = $region56
        $region55: #{protein_branch_gnn.1} parent=51 // pred_region
          %s637 = ssub.s32 16, 16
          %638 = vsyncadd %s630, %s637
          %s639 = smul.addr %s22, 16
          %s640 = scalar_lea.hbm %s8, %s639
          %s642 = sshll.u32 %s632, 4
          %s643 = int_to_ptr.vmem [resolvable:$true] %s642
          %645 = dma.vmem_to_hbm [thread:$0]  %s643, 16, %s640, %s630
        $region56: #{protein_branch_gnn.1} parent=51 // pred_fallthru
          _
      $region52: #{protein_branch_gnn.1} parent=5 // pred_fallthru
        _
      %p646 = scmp.le.s32.totalorder 2, %s17
      // Predicated region
      $region57: #{protein_branch_gnn.1} parent=5 // pred_check
        %p647 = pneg %p646
      $region58: #{protein_branch_gnn.1} parent=5 // pred_check_branch
        %649 = sbr.rel (%p647) target = $region60
      $region59: #{protein_branch_gnn.1} parent=5 // pred_region
        %s650 = ssub.s32 %s17, 2
        // Predicated region
        $region61: #{protein_branch_gnn.1} parent=59 // pred_check
          %p651 = pneg %p224
        $region62: #{protein_branch_gnn.1} parent=59 // pred_check_branch
          %653 = sbr.rel (%p651) target = $region64
        $region63: #{protein_branch_gnn.1} parent=59 // pred_region
          %s654 = sand.u32 %s209, 1
          %s655 = scalar_lea.sflag [#allocation3], %s654
          %s656 = sand.u32 %s209, 1
          %s657 = scalar_lea.vmem [#allocation2], %s656
          %658 = dma.done %s655, 16
        $region64: #{protein_branch_gnn.1} parent=59 // pred_fallthru
          _
      $region60: #{protein_branch_gnn.1} parent=5 // pred_fallthru
        _
    $region6: #{protein_branch_gnn.1} parent=1 // loop_footer
      %s21 = sadd.s32 1, %s17
    $region7: #{protein_branch_gnn.1} parent=1 // loop_footer_branch
      %16 = sbr.rel target = $region3
    $region8: #{protein_branch_gnn.1} parent=1 // loop_exit
      _
    %659 = vsyncpa [#allocation3], 1
    %s660 = scalar_lea.sflag [#allocation3], 1
    %661 = vsyncpa %s660, 1

</llo_original>
